<compile_context>
chip_gen: v6e
topology: v6e:2x2x1
jax: 0.10.0
libtpu: 0.0.40
codegen_flags: <defaults>
</compile_context>

<pallas_src>
import math

import jax
import jax.numpy as jnp
from jax.experimental import pallas as pl
from jax.experimental.pallas import tpu as pltpu


def get_position_encoding(length, hidden_size, min_timescale=1.0, max_timescale=10000.0):
    """Matches PositionalEncoding.get_position_encoding. Returns (length, hidden_size)."""
    position = jnp.arange(length, dtype=jnp.float32)
    num_timescales = hidden_size // 2
    log_timescale_increment = math.log(float(max_timescale) / float(min_timescale)) / (
        float(num_timescales) - 1.0
    )
    inv_timescales = min_timescale * jnp.exp(
        jnp.arange(num_timescales, dtype=jnp.float32) * -log_timescale_increment
    )
    scaled_time = position[:, None] * inv_timescales[None, :]
    return jnp.concatenate([jnp.sin(scaled_time), jnp.cos(scaled_time)], axis=1)


def _round_up(n, m):
    return ((n + m - 1) // m) * m


def precompute_pe_tables(h_pe, w_pe, table_dtype=jnp.float32):
    """Init-time: expand (H, C)/(W, C) tables into lane-dense (C, HW_pad) slabs.

    hpe_full[c, h*W + w] = h_pe[h, c]
    wpe_full[c, h*W + w] = w_pe[w, c]
    HW is padded up to a multiple of 128 so the hot kernel's stores are
    lane-dense (unmasked vst).
    """
    H, C = h_pe.shape
    W, _ = w_pe.shape
    HW = H * W
    HW_pad = _round_up(HW, 128)
    hpe_full = jnp.repeat(h_pe.T.astype(table_dtype), W, axis=1)      # (C, HW)
    wpe_full = jnp.tile(w_pe.T.astype(table_dtype), (1, H))           # (C, HW)
    if HW_pad != HW:
        pad = ((0, 0), (0, HW_pad - HW))
        hpe_full = jnp.pad(hpe_full, pad)
        wpe_full = jnp.pad(wpe_full, pad)
    return hpe_full, wpe_full


# --------------------------------------------------------------------------
# Hot-path kernel: streaming PE add (memory-bound, lane-dense).
#   ah/aw: (C, 1) f32   x/hpe/wpe: (C, hw_tile)   out: (C, hw_tile)
# --------------------------------------------------------------------------
def _pe_add_kernel(ah_ref, aw_ref, x_ref, hpe_ref, wpe_ref, o_ref):
    pe = (
        ah_ref[...] * hpe_ref[...].astype(jnp.float32)
        + aw_ref[...] * wpe_ref[...].astype(jnp.float32)
    )
    o_ref[...] = (x_ref[...].astype(jnp.float32) + pe).astype(o_ref.dtype)


def _pick_hw_tile(hw_pad, per_col_bytes, block_budget_bytes=4 << 20):
    """Largest multiple of 128 dividing hw_pad whose streamed blocks fit budget."""
    cap = max(128, (block_budget_bytes // per_col_bytes) // 128 * 128)
    t = min(cap, hw_pad)
    while hw_pad % t != 0:
        t -= 128
    return max(t, 128)


def positional_encoding_forward(x, w0, b0, w1, b1, hpe_full, wpe_full):
    """x: (B, C, H, W) NCHW. w0: (C//2, C), b0: (C//2,), w1: (2C, C//2), b1: (2C,).
    hpe_full / wpe_full: precomputed (C, HW_pad) tables from precompute_pe_tables.
    """
    B, C, H, W = x.shape
    HW = H * W
    HW_pad = hpe_full.shape[1]
    assert hpe_full.shape == (C, HW_pad) and wpe_full.shape == (C, HW_pad)
    assert HW_pad >= HW and HW_pad % 128 == 0

    # ---- Step 1: alpha MLP (tiny) in plain XLA; f32 accumulation in the reduce.
    # TODO(synk): nn.Dropout(p=0.1) modeled as identity (inference / eval mode).
    xm = jnp.mean(x, axis=(2, 3), dtype=jnp.float32)                   # (B, C)
    z0 = jax.nn.relu(xm @ w0.T.astype(jnp.float32) + b0.astype(jnp.float32))
    alpha = jax.nn.sigmoid(z0 @ w1.T.astype(jnp.float32) + b1.astype(jnp.float32))
    alpha_h = alpha[:, :C].reshape(B, C, 1)
    alpha_w = alpha[:, C:].reshape(B, C, 1)

    # ---- Step 2: lane-dense streaming PE-add over (B, C, HW_pad).
    x_flat = x.reshape(B, C, HW)
    if HW_pad != HW:
        x_flat = jnp.pad(x_flat, ((0, 0), (0, 0), (0, HW_pad - HW)))

    x_bytes = x.dtype.itemsize
    t_bytes = hpe_full.dtype.itemsize
    # Per lane-column VMEM bytes at pipeline depth 2: x in + out + two tables.
    per_col = 2 * C * (2 * x_bytes + 2 * t_bytes)
    hw_tile = _pick_hw_tile(HW_pad, per_col, block_budget_bytes=4 << 20)
    n_s = HW_pad // hw_tile

    # Grid: spatial tiles outer, batch innermost.  The table index_map depends
    # only on the spatial tile, so its block index is constant across the inner
    # B sweep and Pallas skips the table DMA -> each table is read from HBM
    # once per forward (instead of B times), on every TPU generation.
    grid = (n_s, B)

    vmem_estimate = hw_tile * per_col + 4 * 2 * C * 4  # + tiny alpha blocks
    vmem_limit = max(16 << 20, min(48 << 20, int(vmem_estimate) + (4 << 20)))

    out_flat = pl.pallas_call(
        _pe_add_kernel,
        out_shape=jax.ShapeDtypeStruct((B, C, HW_pad), x.dtype),
        grid_spec=pltpu.PrefetchScalarGridSpec(
            num_scalar_prefetch=0,
            grid=grid,
            in_specs=[
                pl.BlockSpec((None, C, 1), lambda s, b: (b, 0, 0)),        # alpha_h
                pl.BlockSpec((None, C, 1), lambda s, b: (b, 0, 0)),        # alpha_w
                pl.BlockSpec((None, C, hw_tile), lambda s, b: (b, 0, s)),  # x
                pl.BlockSpec((C, hw_tile), lambda s, b: (0, s)),           # hpe_full
                pl.BlockSpec((C, hw_tile), lambda s, b: (0, s)),           # wpe_full
            ],
            out_specs=pl.BlockSpec((None, C, hw_tile), lambda s, b: (b, 0, s)),
        ),
        compiler_params=pltpu.CompilerParams(
            dimension_semantics=("parallel", "parallel"),
            vmem_limit_bytes=vmem_limit,
        ),
    )(alpha_h, alpha_w, x_flat, hpe_full, wpe_full)

    if HW_pad != HW:
        out_flat = out_flat[:, :, :HW]
    return out_flat.reshape(B, C, H, W)


def reference_forward(x, w0, b0, w1, b1, h_pe, w_pe):
    """Pure-JAX reference matching the PyTorch forward (dropout in eval mode)."""
    B, C, H, W = x.shape
    xm = jnp.mean(x, axis=(2, 3))                              # (B, C)
    z0 = jax.nn.relu(xm @ w0.T + b0)                           # (B, C//2)
    z1 = jax.nn.sigmoid(z0 @ w1.T + b1)                        # (B, 2C)
    ah, aw = z1[:, :C], z1[:, C:]
    pe = (
        ah[:, None, None, :] * h_pe[None, :, None, :]
        + aw[:, None, None, :] * w_pe[None, None, :, :]
    )                                                          # (B, H, W, C)
    return x + jnp.transpose(pe, (0, 3, 1, 2))


if __name__ == "__main__":
    B, C, H, W = 2, 32, 16, 16  # hidden_size == C; module built with h=H, w=W

    key = jax.random.PRNGKey(0)
    k0, k1, k2, k3, kx = jax.random.split(key, 5)

    # dense0: Linear(C, C//2), xavier_normal_ weight, default (uniform) bias.
    std0 = math.sqrt(2.0 / (C + C // 2))
    w0 = jax.random.normal(k0, (C // 2, C), jnp.float32) * std0
    bound0 = 1.0 / math.sqrt(C)
    b0 = jax.random.uniform(k2, (C // 2,), jnp.float32, -bound0, bound0)

    # dense1: Linear(C//2, 2*C), xavier_normal_ weight, default (uniform) bias.
    std1 = math.sqrt(2.0 / (C // 2 + 2 * C))
    w1 = jax.random.normal(k1, (2 * C, C // 2), jnp.float32) * std1
    bound1 = 1.0 / math.sqrt(C // 2)
    b1 = jax.random.uniform(k3, (2 * C,), jnp.float32, -bound1, bound1)

    # Positional-encoding tables (precomputed in __init__ in the PyTorch module).
    h_pe = get_position_encoding(H, C)      # (H, C)
    w_pe = get_position_encoding(W, C)      # (W, C)
    # Init-time expansion (hoisted out of the forward per perf review).
    hpe_full, wpe_full = precompute_pe_tables(h_pe, w_pe, table_dtype=jnp.float32)

    x = jax.random.normal(kx, (B, C, H, W), jnp.float32)

    fwd = jax.jit(positional_encoding_forward)
    out = fwd(x, w0, b0, w1, b1, hpe_full, wpe_full)
    out = jax.block_until_ready(out)

    ref = reference_forward(x, w0, b0, w1, b1, h_pe, w_pe)
    assert out.shape == (B, C, H, W)
    err = float(jnp.max(jnp.abs(out - ref)))
    assert jnp.allclose(out, ref, atol=2e-5, rtol=2e-5), err

    print("KERNEL_OK")
</pallas_src>

<mosaic_0001>
module attributes {stable_mosaic.version = 11 : i64} {
  func.func @_pe_add_kernel(%arg0: i32, %arg1: i32, %arg2: memref<1x32x1xf32, #tpu.memory_space<vmem>>, %arg3: memref<1x32x1xf32, #tpu.memory_space<vmem>>, %arg4: memref<1x32x256xf32, #tpu.memory_space<vmem>>, %arg5: memref<32x256xf32, #tpu.memory_space<vmem>>, %arg6: memref<32x256xf32, #tpu.memory_space<vmem>>, %arg7: memref<1x32x256xf32, #tpu.memory_space<vmem>>) attributes {dimension_semantics = [#tpu.dimension_semantics<parallel>, #tpu.dimension_semantics<parallel>], iteration_bounds = array<i64: 1, 2>, scalar_prefetch = 0 : i64, scratch_operands = 0 : i64, tpu.core_type = #tpu.core_type<tc>, window_params = [{transform_indices = @transform_0, window_bounds = array<i64: 1, 32, 1>}, {transform_indices = @transform_1, window_bounds = array<i64: 1, 32, 1>}, {transform_indices = @transform_2, window_bounds = array<i64: 1, 32, 256>}, {transform_indices = @transform_3, window_bounds = array<i64: 32, 256>}, {transform_indices = @transform_4, window_bounds = array<i64: 32, 256>}, {transform_indices = @transform_5, window_bounds = array<i64: 1, 32, 256>}]} {
    %c0 = arith.constant 0 : index
    %c0_0 = arith.constant 0 : index
    %c0_1 = arith.constant 0 : index
    %0 = vector.load %arg2[%c0, %c0_0, %c0_1] : memref<1x32x1xf32, #tpu.memory_space<vmem>>, vector<1x32x1xf32>
    %1 = vector.shape_cast %0 : vector<1x32x1xf32> to vector<32x1xf32>
    %c0_2 = arith.constant 0 : index
    %c0_3 = arith.constant 0 : index
    %2 = vector.load %arg5[%c0_2, %c0_3] : memref<32x256xf32, #tpu.memory_space<vmem>>, vector<32x256xf32>
    %3 = vector.broadcast %1 : vector<32x1xf32> to vector<32x256xf32>
    %4 = arith.mulf %3, %2 : vector<32x256xf32>
    %c0_4 = arith.constant 0 : index
    %c0_5 = arith.constant 0 : index
    %c0_6 = arith.constant 0 : index
    %5 = vector.load %arg3[%c0_4, %c0_5, %c0_6] : memref<1x32x1xf32, #tpu.memory_space<vmem>>, vector<1x32x1xf32>
    %6 = vector.shape_cast %5 : vector<1x32x1xf32> to vector<32x1xf32>
    %c0_7 = arith.constant 0 : index
    %c0_8 = arith.constant 0 : index
    %7 = vector.load %arg6[%c0_7, %c0_8] : memref<32x256xf32, #tpu.memory_space<vmem>>, vector<32x256xf32>
    %8 = vector.broadcast %6 : vector<32x1xf32> to vector<32x256xf32>
    %9 = arith.mulf %8, %7 : vector<32x256xf32>
    %10 = arith.addf %4, %9 : vector<32x256xf32>
    %c0_9 = arith.constant 0 : index
    %c0_10 = arith.constant 0 : index
    %c0_11 = arith.constant 0 : index
    %11 = vector.load %arg4[%c0_9, %c0_10, %c0_11] : memref<1x32x256xf32, #tpu.memory_space<vmem>>, vector<1x32x256xf32>
    %12 = vector.shape_cast %11 : vector<1x32x256xf32> to vector<32x256xf32>
    %13 = arith.addf %12, %10 : vector<32x256xf32>
    %c0_12 = arith.constant 0 : index
    %c0_13 = arith.constant 0 : index
    %c0_14 = arith.constant 0 : index
    %14 = vector.load %arg7[%c0_12, %c0_13, %c0_14] : memref<1x32x256xf32, #tpu.memory_space<vmem>>, vector<1x32x256xf32>
    %15 = vector.shape_cast %14 : vector<1x32x256xf32> to vector<32x256xf32>
    %16 = vector.shape_cast %13 : vector<32x256xf32> to vector<1x32x256xf32>
    tpu.vector_store %arg7[%c0_12, %c0_13, %c0_14], %16 {strides = array<i32>} : memref<1x32x256xf32, #tpu.memory_space<vmem>>, vector<1x32x256xf32>,
    return
  }
  func.func @transform_0(%arg0: i32, %arg1: i32) -> (i32, i32, i32) {
    %c0_i32 = arith.constant 0 : i32
    %c0_i32_0 = arith.constant 0 : i32
    %c0_i32_1 = arith.constant 0 : i32
    return %arg1, %c0_i32, %c0_i32_0 : i32, i32, i32
  }
  func.func @transform_1(%arg0: i32, %arg1: i32) -> (i32, i32, i32) {
    %c0_i32 = arith.constant 0 : i32
    %c0_i32_0 = arith.constant 0 : i32
    %c0_i32_1 = arith.constant 0 : i32
    return %arg1, %c0_i32, %c0_i32_0 : i32, i32, i32
  }
  func.func @transform_2(%arg0: i32, %arg1: i32) -> (i32, i32, i32) {
    %c0_i32 = arith.constant 0 : i32
    %c0_i32_0 = arith.constant 0 : i32
    return %arg1, %c0_i32, %arg0 : i32, i32, i32
  }
  func.func @transform_3(%arg0: i32, %arg1: i32) -> (i32, i32) {
    %c0_i32 = arith.constant 0 : i32
    %c0_i32_0 = arith.constant 0 : i32
    return %c0_i32, %arg0 : i32, i32
  }
  func.func @transform_4(%arg0: i32, %arg1: i32) -> (i32, i32) {
    %c0_i32 = arith.constant 0 : i32
    %c0_i32_0 = arith.constant 0 : i32
    return %c0_i32, %arg0 : i32, i32
  }
  func.func @transform_5(%arg0: i32, %arg1: i32) -> (i32, i32, i32) {
    %c0_i32 = arith.constant 0 : i32
    %c0_i32_0 = arith.constant 0 : i32
    return %arg1, %c0_i32, %arg0 : i32, i32, i32
  }
}

</mosaic_0001>

<llo_original>
// kernel: positional_encoding_forward.1
$region0: #{positional_encoding_forward.1}
  #allocation0 [shape = 'u32[]', space=smem, size = 0x4, offset = 0x4, fixed_abs, tag = 'smem constant byte address 0x4 - core index']
  #allocation1 [shape = 'u32[144,128]{1,0:T(1,128)}', space=vmem, size = 0x12000, scoped, tag = 'internal scratch']
  %s0 = inlined_call_operand.vmem [shape: f32[2,32,1], index: 0, kind: input, shape index: {}]
  %s1 = inlined_call_operand.vmem [shape: f32[2,32,1], index: 1, kind: input, shape index: {}]
  %s2 = inlined_call_operand.vmem [shape: f32[2,32,256], index: 2, kind: input, shape index: {}]
  %s3 = inlined_call_operand.vmem [shape: f32[32,256], index: 3, kind: input, shape index: {}]
  %s4 = inlined_call_operand.vmem [shape: f32[32,256], index: 4, kind: input, shape index: {}]
  %s5 = inlined_call_operand.vmem [shape: f32[2,32,256], index: 5, kind: output, shape index: {}]
  %s6 = sld [smem:[#allocation0]]
  $region53: #{positional_encoding_forward.1} parent=0
    _
  %s8 = ssub.s32 1, %s6
  %s9 = scalar_select 0, %s8, %s6
  loop: start=0, step=1, limit=4
  $region2: #{positional_encoding_forward.1} parent=0 // loop_pre_header
    _
  $region3: #{positional_encoding_forward.1} parent=0 // loop_header
    %s11 = sphi 0, %s15
    %p12 = scmp.ge.s32.totalorder %s11, 4
    %s18 = sphi 0, %s30
    %s19 = sphi 0, %s26
    %s20 = sphi 0, %s18
    %s21 = sphi 0, %s19
    %s22 = sphi 0, %s20
    %s23 = sphi 0, %s21
    %s33 = sphi 0, %s35
    %s36 = sphi 0, %s33
    %s37 = sphi 0, %s36
    %s53 = sphi 0, %s37
    %s59 = sphi 0, %s61
    %s62 = sphi 0, %s59
    %s63 = sphi 0, %s62
    %s79 = sphi 0, %s63
    %s87 = sphi 0, %s89
    %s90 = sphi 0, %s87
    %s91 = sphi 0, %s90
    %s107 = sphi 0, %s91
    %s113 = sphi 0, %s115
    %s116 = sphi 0, %s113
    %s117 = sphi 0, %s116
    %s133 = sphi 0, %s117
    %s139 = sphi 0, %s141
    %s142 = sphi 0, %s139
    %s143 = sphi 0, %s142
    %s159 = sphi 0, %s143
    %s167 = sphi 0, %s169
    %s170 = sphi 0, %s167
    %s171 = sphi 0, %s170
    %s187 = sphi 0, %s171
  $region4: #{positional_encoding_forward.1} parent=0 // loop_header_branch
    %14 = sbr.rel (%p12) target = $region8
  $region5: #{positional_encoding_forward.1} parent=0 // loop_body
    %s16 = ssub.s32 %s11, 1
    %s17 = ssub.s32 %s11, 2
    %s24 = sadd.s32 1, %s19
    %p25 = scmp.ge.s32.totalorder %s24, 2
    %s26 = scalar_select %p25, 0, %s24
    %s27 = sadd.s32 1, %s18
    %s28 = scalar_select %p25, %s27, %s18
    %p29 = scmp.ge.s32.totalorder %s28, 1
    %s30 = scalar_select %p29, 0, %s28
    %s31 = ssub.s32 %s19, %s26
    %p32 = scmp.eq.s32.totalorder %s31, 0
    %s34 = sadd.s32 %s33, 1
    %s35 = scalar_select %p32, %s33, %s34
    %p38 = pneg %p32
    %p39 = scmp.eq.s32.totalorder %s11, 1
    %p40 = por %p38, %p39
    %p41 = scmp.ne.s32.totalorder %s33, %s36
    %p42 = scmp.eq.s32.totalorder %s11, 0
    %p43 = por %p41, %p42
    %p44 = scmp.ne.s32.totalorder %s33, %s36
    %p45 = scmp.eq.s32.totalorder %s16, 1
    %p46 = por %p44, %p45
    %p47 = scmp.ne.s32.totalorder %s36, %s37
    %p48 = scmp.eq.s32.totalorder %s16, 0
    %p49 = por %p47, %p48
    %p50 = scmp.ne.s32.totalorder %s36, %s37
    %p51 = scmp.eq.s32.totalorder %s17, 1
    %p52 = por %p50, %p51
    %p54 = scmp.ne.s32.totalorder %s37, %s53
    %p55 = scmp.eq.s32.totalorder %s17, 0
    %p56 = por %p54, %p55
    %s57 = ssub.s32 %s19, %s26
    %p58 = scmp.eq.s32.totalorder %s57, 0
    %s60 = sadd.s32 %s59, 1
    %s61 = scalar_select %p58, %s59, %s60
    %p64 = pneg %p58
    %p65 = scmp.eq.s32.totalorder %s11, 1
    %p66 = por %p64, %p65
    %p67 = scmp.ne.s32.totalorder %s59, %s62
    %p68 = scmp.eq.s32.totalorder %s11, 0
    %p69 = por %p67, %p68
    %p70 = scmp.ne.s32.totalorder %s59, %s62
    %p71 = scmp.eq.s32.totalorder %s16, 1
    %p72 = por %p70, %p71
    %p73 = scmp.ne.s32.totalorder %s62, %s63
    %p74 = scmp.eq.s32.totalorder %s16, 0
    %p75 = por %p73, %p74
    %p76 = scmp.ne.s32.totalorder %s62, %s63
    %p77 = scmp.eq.s32.totalorder %s17, 1
    %p78 = por %p76, %p77
    %p80 = scmp.ne.s32.totalorder %s63, %s79
    %p81 = scmp.eq.s32.totalorder %s17, 0
    %p82 = por %p80, %p81
    %s83 = ssub.s32 %s19, %s26
    %s84 = ssub.s32 %s18, %s30
    %s85 = sor.u32 %s83, %s84
    %p86 = scmp.eq.s32.totalorder %s85, 0
    %s88 = sadd.s32 %s87, 1
    %s89 = scalar_select %p86, %s87, %s88
    %p92 = pneg %p86
    %p93 = scmp.eq.s32.totalorder %s11, 1
    %p94 = por %p92, %p93
    %p95 = scmp.ne.s32.totalorder %s87, %s90
    %p96 = scmp.eq.s32.totalorder %s11, 0
    %p97 = por %p95, %p96
    %p98 = scmp.ne.s32.totalorder %s87, %s90
    %p99 = scmp.eq.s32.totalorder %s16, 1
    %p100 = por %p98, %p99
    %p101 = scmp.ne.s32.totalorder %s90, %s91
    %p102 = scmp.eq.s32.totalorder %s16, 0
    %p103 = por %p101, %p102
    %p104 = scmp.ne.s32.totalorder %s90, %s91
    %p105 = scmp.eq.s32.totalorder %s17, 1
    %p106 = por %p104, %p105
    %p108 = scmp.ne.s32.totalorder %s91, %s107
    %p109 = scmp.eq.s32.totalorder %s17, 0
    %p110 = por %p108, %p109
    %s111 = ssub.s32 %s18, %s30
    %p112 = scmp.eq.s32.totalorder %s111, 0
    %s114 = sadd.s32 %s113, 1
    %s115 = scalar_select %p112, %s113, %s114
    %p118 = pneg %p112
    %p119 = scmp.eq.s32.totalorder %s11, 1
    %p120 = por %p118, %p119
    %p121 = scmp.ne.s32.totalorder %s113, %s116
    %p122 = scmp.eq.s32.totalorder %s11, 0
    %p123 = por %p121, %p122
    %p124 = scmp.ne.s32.totalorder %s113, %s116
    %p125 = scmp.eq.s32.totalorder %s16, 1
    %p126 = por %p124, %p125
    %p127 = scmp.ne.s32.totalorder %s116, %s117
    %p128 = scmp.eq.s32.totalorder %s16, 0
    %p129 = por %p127, %p128
    %p130 = scmp.ne.s32.totalorder %s116, %s117
    %p131 = scmp.eq.s32.totalorder %s17, 1
    %p132 = por %p130, %p131
    %p134 = scmp.ne.s32.totalorder %s117, %s133
    %p135 = scmp.eq.s32.totalorder %s17, 0
    %p136 = por %p134, %p135
    %s137 = ssub.s32 %s18, %s30
    %p138 = scmp.eq.s32.totalorder %s137, 0
    %s140 = sadd.s32 %s139, 1
    %s141 = scalar_select %p138, %s139, %s140
    %p144 = pneg %p138
    %p145 = scmp.eq.s32.totalorder %s11, 1
    %p146 = por %p144, %p145
    %p147 = scmp.ne.s32.totalorder %s139, %s142
    %p148 = scmp.eq.s32.totalorder %s11, 0
    %p149 = por %p147, %p148
    %p150 = scmp.ne.s32.totalorder %s139, %s142
    %p151 = scmp.eq.s32.totalorder %s16, 1
    %p152 = por %p150, %p151
    %p153 = scmp.ne.s32.totalorder %s142, %s143
    %p154 = scmp.eq.s32.totalorder %s16, 0
    %p155 = por %p153, %p154
    %p156 = scmp.ne.s32.totalorder %s142, %s143
    %p157 = scmp.eq.s32.totalorder %s17, 1
    %p158 = por %p156, %p157
    %p160 = scmp.ne.s32.totalorder %s143, %s159
    %p161 = scmp.eq.s32.totalorder %s17, 0
    %p162 = por %p160, %p161
    %s163 = ssub.s32 %s19, %s26
    %s164 = ssub.s32 %s18, %s30
    %s165 = sor.u32 %s163, %s164
    %p166 = scmp.eq.s32.totalorder %s165, 0
    %s168 = sadd.s32 %s167, 1
    %s169 = scalar_select %p166, %s167, %s168
    %p172 = pneg %p166
    %p173 = scmp.eq.s32.totalorder %s11, 1
    %p174 = por %p172, %p173
    %p175 = scmp.ne.s32.totalorder %s167, %s170
    %p176 = scmp.eq.s32.totalorder %s11, 0
    %p177 = por %p175, %p176
    %p178 = scmp.ne.s32.totalorder %s167, %s170
    %p179 = scmp.eq.s32.totalorder %s16, 1
    %p180 = por %p178, %p179
    %p181 = scmp.ne.s32.totalorder %s170, %s171
    %p182 = scmp.eq.s32.totalorder %s16, 0
    %p183 = por %p181, %p182
    %p184 = scmp.ne.s32.totalorder %s170, %s171
    %p185 = scmp.eq.s32.totalorder %s17, 1
    %p186 = por %p184, %p185
    %p188 = scmp.ne.s32.totalorder %s171, %s187
    %p189 = scmp.eq.s32.totalorder %s17, 0
    %p190 = por %p188, %p189
    %p191 = scmp.le.s32.totalorder 1, %s11
    %p192 = scmp.lt.s32.totalorder %s11, 3
    %p193 = pnand %p191, %p192
    %p194 = pneg %p193
    // Predicated region
    $region9: #{positional_encoding_forward.1} parent=5 // pred_check
      _
    $region10: #{positional_encoding_forward.1} parent=5 // pred_check_branch
      %196 = sbr.rel (%p193) target = $region12
    $region11: #{positional_encoding_forward.1} parent=5 // pred_region
      %s197 = ssub.s32 %s11, 1
      // Predicated region
      $region13: #{positional_encoding_forward.1} parent=11 // pred_check
        %p198 = pneg %p129
      $region14: #{positional_encoding_forward.1} parent=11 // pred_check_branch
        %200 = sbr.rel (%p198) target = $region16
      $region15: #{positional_encoding_forward.1} parent=11 // pred_region
        %s201 = smul.u32 2, %s20
        %p202 = scmp.lt.s32.totalorder %s201, 1
        %s203 = scalar_select %p202, %s201, 1
        %s204 = smul.addr %s203, 8
        %s205 = scalar_lea.vmem %s3, %s204
        %s206 = smul.u32 2, %s20
      $region16: #{positional_encoding_forward.1} parent=11 // pred_fallthru
        _
      // Predicated region
      $region17: #{positional_encoding_forward.1} parent=11 // pred_check
        %p207 = pneg %p155
      $region18: #{positional_encoding_forward.1} parent=11 // pred_check_branch
        %209 = sbr.rel (%p207) target = $region20
      $region19: #{positional_encoding_forward.1} parent=11 // pred_region
        %s210 = smul.u32 2, %s20
        %p211 = scmp.lt.s32.totalorder %s210, 1
        %s212 = scalar_select %p211, %s210, 1
        %s213 = smul.addr %s212, 8
        %s214 = scalar_lea.vmem %s4, %s213
        %s215 = smul.u32 2, %s20
      $region20: #{positional_encoding_forward.1} parent=11 // pred_fallthru
        _
    $region12: #{positional_encoding_forward.1} parent=5 // pred_fallthru
      _
    %p216 = scmp.lt.s32.totalorder %s11, 2
    // Predicated region
    $region21: #{positional_encoding_forward.1} parent=5 // pred_check
      %p217 = pneg %p216
    $region22: #{positional_encoding_forward.1} parent=5 // pred_check_branch
      %219 = sbr.rel (%p217) target = $region24
    $region23: #{positional_encoding_forward.1} parent=5 // pred_region
      // Predicated region
      $region25: #{positional_encoding_forward.1} parent=23 // pred_check
        %p220 = pneg %p43
      $region26: #{positional_encoding_forward.1} parent=23 // pred_check_branch
        %222 = sbr.rel (%p220) target = $region28
      $region27: #{positional_encoding_forward.1} parent=23 // pred_region
        %p223 = scmp.lt.s32.totalorder %s19, 1
        %s224 = scalar_select %p223, %s19, 1
        %s225 = smul.addr %s224, 4
        %s226 = smul.addr %s225, 8
        %s227 = scalar_lea.vmem %s0, %s226
      $region28: #{positional_encoding_forward.1} parent=23 // pred_fallthru
        _
      // Predicated region
      $region29: #{positional_encoding_forward.1} parent=23 // pred_check
        %p228 = pneg %p69
      $region30: #{positional_encoding_forward.1} parent=23 // pred_check_branch
        %230 = sbr.rel (%p228) target = $region32
      $region31: #{positional_encoding_forward.1} parent=23 // pred_region
        %p231 = scmp.lt.s32.totalorder %s19, 1
        %s232 = scalar_select %p231, %s19, 1
        %s233 = smul.addr %s232, 4
        %s234 = smul.addr %s233, 8
        %s235 = scalar_lea.vmem %s1, %s234
      $region32: #{positional_encoding_forward.1} parent=23 // pred_fallthru
        _
      // Predicated region
      $region33: #{positional_encoding_forward.1} parent=23 // pred_check
        %p236 = pneg %p97
      $region34: #{positional_encoding_forward.1} parent=23 // pred_check_branch
        %238 = sbr.rel (%p236) target = $region36
      $region35: #{positional_encoding_forward.1} parent=23 // pred_region
        %s239 = smul.u32 2, %s18
        %p240 = scmp.lt.s32.totalorder %s19, 1
        %s241 = scalar_select %p240, %s19, 1
        %p242 = scmp.lt.s32.totalorder %s239, 1
        %s243 = scalar_select %p242, %s239, 1
        %s244 = smul.addr %s241, 8
        %s245 = sadd.s32 %s243, %s244
        %s246 = smul.addr %s245, 8
        %s247 = scalar_lea.vmem %s2, %s246
        %s248 = smul.u32 2, %s18
      $region36: #{positional_encoding_forward.1} parent=23 // pred_fallthru
        _
    $region24: #{positional_encoding_forward.1} parent=5 // pred_fallthru
      _
    %p249 = scmp.le.s32.totalorder 1, %s11
    %p250 = scmp.lt.s32.totalorder %s11, 3
    %p251 = pnand %p249, %p250
    %p252 = pneg %p251
    // Predicated region
    $region37: #{positional_encoding_forward.1} parent=5 // pred_check
      _
    $region38: #{positional_encoding_forward.1} parent=5 // pred_check_branch
      %254 = sbr.rel (%p251) target = $region40
    $region39: #{positional_encoding_forward.1} parent=5 // pred_region
      %s255 = ssub.s32 %s11, 1
      %p256 = scmp.lt.s32.totalorder %s21, 1
      %s257 = scalar_select %p256, %s21, 1
      %s258 = smul.addr %s257, 4
      %s259 = smul.addr %s258, 8
      %s260 = scalar_lea.vmem %s0, %s259
      %p261 = pneg %p49
      %p262 = pneg %p46
      %p263 = scmp.lt.s32.totalorder %s21, 1
      %s264 = scalar_select %p263, %s21, 1
      %s265 = smul.addr %s264, 4
      %s266 = smul.addr %s265, 8
      %s267 = scalar_lea.vmem %s1, %s266
      %p268 = pneg %p75
      %p269 = pneg %p72
      %s270 = smul.u32 2, %s20
      %p271 = scmp.lt.s32.totalorder %s21, 1
      %s272 = scalar_select %p271, %s21, 1
      %p273 = scmp.lt.s32.totalorder %s270, 1
      %s274 = scalar_select %p273, %s270, 1
      %s275 = smul.addr %s272, 8
      %s276 = sadd.s32 %s274, %s275
      %s277 = smul.addr %s276, 8
      %s278 = scalar_lea.vmem %s2, %s277
      %p279 = pneg %p103
      %p280 = pneg %p100
      %s281 = smul.u32 2, %s20
      %p282 = scmp.lt.s32.totalorder %s281, 1
      %s283 = scalar_select %p282, %s281, 1
      %s284 = smul.addr %s283, 8
      %s285 = scalar_lea.vmem %s3, %s284
      %p286 = pneg %p129
      %p287 = pneg %p126
      %s288 = smul.u32 2, %s20
      %p289 = scmp.lt.s32.totalorder %s288, 1
      %s290 = scalar_select %p289, %s288, 1
      %s291 = smul.addr %s290, 8
      %s292 = scalar_lea.vmem %s4, %s291
      %p293 = pneg %p155
      %p294 = pneg %p152
      %p295 = pneg %p183
      %p296 = pneg %p180
      %s297 = smul.u32 2, %s20
      %p298 = scmp.lt.s32.totalorder %s21, 1
      %s299 = scalar_select %p298, %s21, 1
      %p300 = scmp.lt.s32.totalorder %s297, 1
      %s301 = scalar_select %p300, %s297, 1
      %s302 = smul.addr %s299, 8
      %s303 = sadd.s32 %s301, %s302
      %s304 = smul.addr %s303, 8
      %s305 = scalar_lea.vmem %s5, %s304
      %p306 = scmp.lt.s32.totalorder %s21, 1
      %s307 = scalar_select %p306, %s21, 1
      %s308 = smul.addr %s307, 4
      %s309 = smul.addr %s308, 8
      %s310 = scalar_lea.vmem %s0, %s309
      %p311 = scmp.lt.s32.totalorder %s21, 1
      %s312 = scalar_select %p311, %s21, 1
      %s313 = smul.addr %s312, 4
      %s314 = smul.addr %s313, 8
      %s315 = scalar_lea.vmem %s1, %s314
      %s316 = smul.u32 2, %s20
      %p317 = scmp.lt.s32.totalorder %s21, 1
      %s318 = scalar_select %p317, %s21, 1
      %p319 = scmp.lt.s32.totalorder %s316, 1
      %s320 = scalar_select %p319, %s316, 1
      %s321 = smul.addr %s318, 8
      %s322 = sadd.s32 %s320, %s321
      %s323 = smul.addr %s322, 8
      %s324 = scalar_lea.vmem %s2, %s323
      %s325 = smul.u32 2, %s20
      %s326 = smul.u32 2, %s20
      %p327 = scmp.lt.s32.totalorder %s326, 1
      %s328 = scalar_select %p327, %s326, 1
      %s329 = smul.addr %s328, 8
      %s330 = scalar_lea.vmem %s3, %s329
      %s331 = smul.u32 2, %s20
      %s332 = smul.u32 2, %s20
      %p333 = scmp.lt.s32.totalorder %s332, 1
      %s334 = scalar_select %p333, %s332, 1
      %s335 = smul.addr %s334, 8
      %s336 = scalar_lea.vmem %s4, %s335
      %s337 = smul.u32 2, %s20
      %s338 = smul.u32 2, %s20
      %p339 = scmp.lt.s32.totalorder %s21, 1
      %s340 = scalar_select %p339, %s21, 1
      %p341 = scmp.lt.s32.totalorder %s338, 1
      %s342 = scalar_select %p341, %s338, 1
      %s343 = smul.addr %s340, 8
      %s344 = sadd.s32 %s342, %s343
      %s345 = smul.addr %s344, 8
      %s346 = scalar_lea.vmem %s5, %s345
      %s347 = smul.u32 2, %s20
      %v348 = vld [vmem:[%s310] sm:$0xff]
      %v349 = vld [vmem:[%s310 + $0x8] sm:$0xff]
      %v350 = vld [vmem:[%s310 + $0x10] sm:$0xff]
      %v351 = vld [vmem:[%s310 + $0x18] sm:$0xff]
      %v352 = vld [vmem:[%s330] sm:$0xff]
      %v353 = vld [vmem:[%s330 + $0x8] sm:$0xff]
      %v354 = vld [vmem:[%s330 + $0x10] sm:$0xff]
      %v355 = vld [vmem:[%s330 + $0x18] sm:$0xff]
      %v356 = vld [vmem:[%s330 + $0x20] sm:$0xff]
      %v357 = vld [vmem:[%s330 + $0x28] sm:$0xff]
      %v358 = vld [vmem:[%s330 + $0x30] sm:$0xff]
      %v359 = vld [vmem:[%s330 + $0x38] sm:$0xff]
      %361 = vset.pattern.permute.xlu0 0
      %362 = vperm.xlu0 %361, %v348
      %v363 = vpop.permute.xlu0 %362
      %366 = vset.pattern.permute.xlu0 0
      %367 = vperm.xlu0 %366, %v349
      %v368 = vpop.permute.xlu0 %367
      %371 = vset.pattern.permute.xlu0 0
      %372 = vperm.xlu0 %371, %v350
      %v373 = vpop.permute.xlu0 %372
      %376 = vset.pattern.permute.xlu0 0
      %377 = vperm.xlu0 %376, %v351
      %v378 = vpop.permute.xlu0 %377
      %v380 = vmul.f32 %v363, %v352
      %v381 = vmul.f32 %v363, %v353
      %v382 = vmul.f32 %v368, %v354
      %v383 = vmul.f32 %v368, %v355
      %v384 = vmul.f32 %v373, %v356
      %v385 = vmul.f32 %v373, %v357
      %v386 = vmul.f32 %v378, %v358
      %v387 = vmul.f32 %v378, %v359
      %v388 = vld [vmem:[%s315] sm:$0xff]
      %v389 = vld [vmem:[%s315 + $0x8] sm:$0xff]
      %v390 = vld [vmem:[%s315 + $0x10] sm:$0xff]
      %v391 = vld [vmem:[%s315 + $0x18] sm:$0xff]
      %v392 = vld [vmem:[%s336] sm:$0xff]
      %v393 = vld [vmem:[%s336 + $0x8] sm:$0xff]
      %v394 = vld [vmem:[%s336 + $0x10] sm:$0xff]
      %v395 = vld [vmem:[%s336 + $0x18] sm:$0xff]
      %v396 = vld [vmem:[%s336 + $0x20] sm:$0xff]
      %v397 = vld [vmem:[%s336 + $0x28] sm:$0xff]
      %v398 = vld [vmem:[%s336 + $0x30] sm:$0xff]
      %v399 = vld [vmem:[%s336 + $0x38] sm:$0xff]
      %401 = vset.pattern.permute.xlu0 0
      %402 = vperm.xlu0 %401, %v388
      %v403 = vpop.permute.xlu0 %402
      %406 = vset.pattern.permute.xlu0 0
      %407 = vperm.xlu0 %406, %v389
      %v408 = vpop.permute.xlu0 %407
      %411 = vset.pattern.permute.xlu0 0
      %412 = vperm.xlu0 %411, %v390
      %v413 = vpop.permute.xlu0 %412
      %416 = vset.pattern.permute.xlu0 0
      %417 = vperm.xlu0 %416, %v391
      %v418 = vpop.permute.xlu0 %417
      %v420 = vmul.f32 %v403, %v392
      %v421 = vmul.f32 %v403, %v393
      %v422 = vmul.f32 %v408, %v394
      %v423 = vmul.f32 %v408, %v395
      %v424 = vmul.f32 %v413, %v396
      %v425 = vmul.f32 %v413, %v397
      %v426 = vmul.f32 %v418, %v398
      %v427 = vmul.f32 %v418, %v399
      %v428 = vadd.f32 %v380, %v420
      %v429 = vadd.f32 %v381, %v421
      %v430 = vadd.f32 %v382, %v422
      %v431 = vadd.f32 %v383, %v423
      %v432 = vadd.f32 %v384, %v424
      %v433 = vadd.f32 %v385, %v425
      %v434 = vadd.f32 %v386, %v426
      %v435 = vadd.f32 %v387, %v427
      %v436 = vld [vmem:[%s324] sm:$0xff]
      %v437 = vld [vmem:[%s324 + $0x8] sm:$0xff]
      %v438 = vld [vmem:[%s324 + $0x10] sm:$0xff]
      %v439 = vld [vmem:[%s324 + $0x18] sm:$0xff]
      %v440 = vld [vmem:[%s324 + $0x20] sm:$0xff]
      %v441 = vld [vmem:[%s324 + $0x28] sm:$0xff]
      %v442 = vld [vmem:[%s324 + $0x30] sm:$0xff]
      %v443 = vld [vmem:[%s324 + $0x38] sm:$0xff]
      %v444 = vadd.f32 %v436, %v428
      %v445 = vadd.f32 %v437, %v429
      %v446 = vadd.f32 %v438, %v430
      %v447 = vadd.f32 %v439, %v431
      %v448 = vadd.f32 %v440, %v432
      %v449 = vadd.f32 %v441, %v433
      %v450 = vadd.f32 %v442, %v434
      %v451 = vadd.f32 %v443, %v435
      %452 = vst [vmem:[%s346] sm:$0xff] %v444
      %453 = vst [vmem:[%s346 + $0x8] sm:$0xff] %v445
      %454 = vst [vmem:[%s346 + $0x10] sm:$0xff] %v446
      %455 = vst [vmem:[%s346 + $0x18] sm:$0xff] %v447
      %456 = vst [vmem:[%s346 + $0x20] sm:$0xff] %v448
      %457 = vst [vmem:[%s346 + $0x28] sm:$0xff] %v449
      %458 = vst [vmem:[%s346 + $0x30] sm:$0xff] %v450
      %459 = vst [vmem:[%s346 + $0x38] sm:$0xff] %v451
      %s460 = smul.u32 2, %s20
      %p461 = scmp.lt.s32.totalorder %s21, 1
      %s462 = scalar_select %p461, %s21, 1
      %p463 = scmp.lt.s32.totalorder %s460, 1
      %s464 = scalar_select %p463, %s460, 1
      %s465 = smul.addr %s462, 8
      %s466 = sadd.s32 %s464, %s465
      %s467 = smul.addr %s466, 8
      %s468 = scalar_lea.vmem %s5, %s467
      // Predicated region
      $region41: #{positional_encoding_forward.1} parent=39 // pred_check
        %p469 = pneg %p180
      $region42: #{positional_encoding_forward.1} parent=39 // pred_check_branch
        %471 = sbr.rel (%p469) target = $region44
      $region43: #{positional_encoding_forward.1} parent=39 // pred_region
        %s472 = smul.u32 2, %s20
      $region44: #{positional_encoding_forward.1} parent=39 // pred_fallthru
        _
    $region40: #{positional_encoding_forward.1} parent=5 // pred_fallthru
      _
    %p473 = scmp.le.s32.totalorder 2, %s11
    // Predicated region
    $region45: #{positional_encoding_forward.1} parent=5 // pred_check
      %p474 = pneg %p473
    $region46: #{positional_encoding_forward.1} parent=5 // pred_check_branch
      %476 = sbr.rel (%p474) target = $region48
    $region47: #{positional_encoding_forward.1} parent=5 // pred_region
      %s477 = ssub.s32 %s11, 2
      // Predicated region
      $region49: #{positional_encoding_forward.1} parent=47 // pred_check
        %p478 = pneg %p186
      $region50: #{positional_encoding_forward.1} parent=47 // pred_check_branch
        %480 = sbr.rel (%p478) target = $region52
      $region51: #{positional_encoding_forward.1} parent=47 // pred_region
        %s481 = smul.u32 2, %s22
        %p482 = scmp.lt.s32.totalorder %s23, 1
        %s483 = scalar_select %p482, %s23, 1
        %p484 = scmp.lt.s32.totalorder %s481, 1
        %s485 = scalar_select %p484, %s481, 1
        %s486 = smul.addr %s483, 8
        %s487 = sadd.s32 %s485, %s486
        %s488 = smul.addr %s487, 8
        %s489 = scalar_lea.vmem %s5, %s488
      $region52: #{positional_encoding_forward.1} parent=47 // pred_fallthru
        _
    $region48: #{positional_encoding_forward.1} parent=5 // pred_fallthru
      _
  $region6: #{positional_encoding_forward.1} parent=0 // loop_footer
    %s15 = sadd.s32 1, %s11
  $region7: #{positional_encoding_forward.1} parent=0 // loop_footer_branch
    %10 = sbr.rel target = $region3
  $region8: #{positional_encoding_forward.1} parent=0 // loop_exit
    _

</llo_original>
